<compile_context>
chip_gen: v7x
topology: tpu7x:2x2x1
jax: 0.10.0
libtpu: 0.0.40
codegen_flags: <defaults>
</compile_context>

<pallas_src>
import functools

import jax
import jax.numpy as jnp
from jax.experimental import pallas as pl
from jax.experimental.pallas import tpu as pltpu

LANE = 128
SUBLANE = 8


def _round_up(x: int, m: int) -> int:
    return ((x + m - 1) // m) * m


def _actor_kernel(*refs, n_layers: int, max_action: float):
    """refs = (obs, w0, b0, w1, b1, ..., w_out, b_out, out_ref).

    obs block:   [TB, obs_dim_p]  f32
    weights:     [in_p, out_p]    bf16 (resident, full-extent blocks)
    biases:      [1, out_p]       f32
    out block:   [TB, action_dim_p] f32
    """
    obs_ref = refs[0]
    out_ref = refs[-1]
    param_refs = refs[1:-1]  # alternating (w, b), n_layers + 1 pairs

    x = obs_ref[...].astype(jnp.float32)

    # Hidden layers: Linear + ReLU (matmul in weight dtype, accumulate f32).
    for layer in range(n_layers):
        w = param_refs[2 * layer][...]
        b = param_refs[2 * layer + 1][...]
        x = jnp.dot(x.astype(w.dtype), w, preferred_element_type=jnp.float32) + b
        x = jnp.maximum(x, 0.0)

    # Output layer: Linear + tanh, scaled by max_action (all f32 elementwise).
    w = param_refs[2 * n_layers][...]
    b = param_refs[2 * n_layers + 1][...]
    a = jnp.dot(x.astype(w.dtype), w, preferred_element_type=jnp.float32) + b
    out_ref[...] = (max_action * jnp.tanh(a)).astype(out_ref.dtype)


def actor_forward(obs, weights, biases, max_action: float,
                  *, block_batch: int = 512, param_dtype=jnp.bfloat16):
    """Run the fused MLP actor kernel.

    obs:     [batch, obs_dim] float32
    weights: list of [in, out] float32 matrices (n_layers hidden + 1 output)
    biases:  list of [1, out] (or [out]) float32 vectors
    """
    n_layers = len(weights) - 1
    batch, obs_dim = obs.shape
    action_dim = weights[-1].shape[1]

    # ---- lane-dense padded dimensions -------------------------------------
    obs_dim_p = _round_up(obs_dim, LANE)
    out_dims = [int(w.shape[1]) for w in weights]
    out_dims_p = [_round_up(d, LANE) for d in out_dims]
    in_dims_p = [obs_dim_p] + out_dims_p[:-1]
    action_dim_p = out_dims_p[-1]

    # ---- batch tiling -------------------------------------------------------
    tb = min(block_batch, _round_up(batch, SUBLANE))
    tb = _round_up(tb, SUBLANE)
    batch_p = _round_up(batch, tb)
    n_blocks = batch_p // tb

    # ---- pad inputs / params (zeros keep the math identical) --------------
    obs_p = jnp.pad(obs.astype(jnp.float32),
                    ((0, batch_p - batch), (0, obs_dim_p - obs_dim)))

    params = []
    for li, (w, b) in enumerate(zip(weights, biases)):
        in_p, out_p = in_dims_p[li], out_dims_p[li]
        w_p = jnp.pad(w, ((0, in_p - w.shape[0]), (0, out_p - w.shape[1])))
        b2 = b.reshape(1, -1)
        b_p = jnp.pad(b2, ((0, 0), (0, out_p - b2.shape[1])))
        params.append(w_p.astype(param_dtype))
        params.append(b_p.astype(jnp.float32))

    # ---- specs --------------------------------------------------------------
    in_specs = [pl.BlockSpec((tb, obs_dim_p), lambda i: (i, 0))]
    for p in params:
        # full-extent resident blocks; constant index_map -> DMA'd once.
        in_specs.append(pl.BlockSpec(p.shape, lambda i: (0, 0)))
    out_spec = pl.BlockSpec((tb, action_dim_p), lambda i: (i, 0))

    # ---- cost estimate ------------------------------------------------------
    flops = 2 * batch_p * sum(in_dims_p[i] * out_dims_p[i] for i in range(len(weights)))
    transcendentals = batch_p * action_dim_p  # tanh
    param_bytes = sum(int(p.size) * p.dtype.itemsize for p in params)
    bytes_accessed = (int(obs_p.size) * 4 + param_bytes + batch_p * action_dim_p * 4)
    cost = pl.CostEstimate(flops=int(flops),
                           transcendentals=int(transcendentals),
                           bytes_accessed=int(bytes_accessed))

    # ---- VMEM budget (resident params + double-buffered obs/out + activations)
    block_io_bytes = 4 * tb * (obs_dim_p + action_dim_p)
    act_bytes = 4 * tb * max(out_dims_p + [obs_dim_p])
    vmem_limit = int(min(max(2 * (param_bytes + 2 * block_io_bytes + 2 * act_bytes),
                             4 << 20),
                         32 << 20))

    kernel = functools.partial(_actor_kernel, n_layers=n_layers, max_action=max_action)

    out_p = pl.pallas_call(
        kernel,
        out_shape=jax.ShapeDtypeStruct((batch_p, action_dim_p), jnp.float32),
        grid=(n_blocks,),
        in_specs=in_specs,
        out_specs=out_spec,
        compiler_params=pltpu.CompilerParams(
            dimension_semantics=("parallel",),
            vmem_limit_bytes=vmem_limit,
        ),
        cost_estimate=cost,
    )(obs_p, *params)

    return out_p[:batch, :action_dim]


def init_actor_params(key, obs_dim, action_dim, hidden_dim, n_layers):
    """Deterministic parameter init (Kaiming-uniform-ish, like nn.Linear defaults)."""
    dims = [obs_dim] + [hidden_dim] * n_layers + [action_dim]
    weights, biases = [], []
    for i in range(len(dims) - 1):
        key, wk, bk = jax.random.split(key, 3)
        fan_in = dims[i]
        bound = 1.0 / (fan_in ** 0.5)
        w = jax.random.uniform(wk, (dims[i], dims[i + 1]), jnp.float32, -bound, bound)
        b = jax.random.uniform(bk, (1, dims[i + 1]), jnp.float32, -bound, bound)
        weights.append(w)
        biases.append(b)
    return weights, biases


def actor_forward_ref(obs, weights, biases, max_action, param_dtype=jnp.bfloat16):
    """Pure-JAX reference matching the kernel's bf16-matmul / f32-accumulate math."""
    x = obs.astype(jnp.float32)
    for w, b in zip(weights[:-1], biases[:-1]):
        x = jnp.dot(x.astype(param_dtype), w.astype(param_dtype),
                    preferred_element_type=jnp.float32) + b.reshape(1, -1)
        x = jnp.maximum(x, 0.0)
    a = jnp.dot(x.astype(param_dtype), weights[-1].astype(param_dtype),
                preferred_element_type=jnp.float32) + biases[-1].reshape(1, -1)
    return max_action * jnp.tanh(a)


def actor_forward_ref_f32(obs, weights, biases, max_action):
    """Pure f32 reference (module semantics) for a loose sanity check."""
    x = obs
    for w, b in zip(weights[:-1], biases[:-1]):
        x = jnp.maximum(x @ w + b, 0.0)
    return max_action * jnp.tanh(x @ weights[-1] + biases[-1])


if __name__ == "__main__":
    # Small shapes consistent with a TD3-BC actor; batch chosen to exercise the
    # batch grid (multiple blocks) and padding (batch not a multiple of the tile).
    batch = 50
    obs_dim = 16
    action_dim = 8
    hidden_dim = 32
    n_layers = 2
    max_action = 1.0
    block_batch = 16  # -> grid of ceil(50/16)=4 batch blocks

    key = jax.random.PRNGKey(0)
    key, obs_key = jax.random.split(key)
    obs = jax.random.normal(obs_key, (batch, obs_dim), jnp.float32)

    weights, biases = init_actor_params(key, obs_dim, action_dim, hidden_dim, n_layers)

    out = actor_forward(obs, weights, biases, max_action, block_batch=block_batch)
    out = jax.block_until_ready(out)

    ref_bf16 = actor_forward_ref(obs, weights, biases, max_action)
    ref_f32 = actor_forward_ref_f32(obs, weights, biases, max_action)

    assert out.shape == (batch, action_dim)
    assert jnp.allclose(out, ref_bf16, atol=1e-3, rtol=1e-3), "mismatch vs bf16-matmul reference"
    assert jnp.allclose(out, ref_f32, atol=5e-2, rtol=5e-2), "mismatch vs f32 reference"

    print("KERNEL_OK")
</pallas_src>

<mosaic_0001>
module attributes {stable_mosaic.version = 11 : i64} {
  func.func @_actor_kernel(%arg0: i32, %arg1: memref<16x128xf32, #tpu.memory_space<vmem>>, %arg2: memref<128x128xbf16, #tpu.memory_space<vmem>>, %arg3: memref<1x128xf32, #tpu.memory_space<vmem>>, %arg4: memref<128x128xbf16, #tpu.memory_space<vmem>>, %arg5: memref<1x128xf32, #tpu.memory_space<vmem>>, %arg6: memref<128x128xbf16, #tpu.memory_space<vmem>>, %arg7: memref<1x128xf32, #tpu.memory_space<vmem>>, %arg8: memref<16x128xf32, #tpu.memory_space<vmem>>) attributes {dimension_semantics = [#tpu.dimension_semantics<parallel>], iteration_bounds = array<i64: 4>, scalar_prefetch = 0 : i64, scratch_operands = 0 : i64, tpu.core_type = #tpu.core_type<tc>, window_params = [{transform_indices = @transform_0, window_bounds = array<i64: 16, 128>}, {pipeline_mode = #tpu.pipeline_mode<synchronous>, transform_indices = @transform_1, window_bounds = array<i64: 128, 128>}, {pipeline_mode = #tpu.pipeline_mode<synchronous>, transform_indices = @transform_2, window_bounds = array<i64: 1, 128>}, {pipeline_mode = #tpu.pipeline_mode<synchronous>, transform_indices = @transform_3, window_bounds = array<i64: 128, 128>}, {pipeline_mode = #tpu.pipeline_mode<synchronous>, transform_indices = @transform_4, window_bounds = array<i64: 1, 128>}, {pipeline_mode = #tpu.pipeline_mode<synchronous>, transform_indices = @transform_5, window_bounds = array<i64: 128, 128>}, {pipeline_mode = #tpu.pipeline_mode<synchronous>, transform_indices = @transform_6, window_bounds = array<i64: 1, 128>}, {transform_indices = @transform_7, window_bounds = array<i64: 16, 128>}]} {
    %c0 = arith.constant 0 : index
    %c0_0 = arith.constant 0 : index
    %0 = vector.load %arg1[%c0, %c0_0] : memref<16x128xf32, #tpu.memory_space<vmem>>, vector<16x128xf32>
    %c0_1 = arith.constant 0 : index
    %c0_2 = arith.constant 0 : index
    %1 = vector.load %arg2[%c0_1, %c0_2] : memref<128x128xbf16, #tpu.memory_space<vmem>>, vector<128x128xbf16>
    %c0_3 = arith.constant 0 : index
    %c0_4 = arith.constant 0 : index
    %2 = vector.load %arg3[%c0_3, %c0_4] : memref<1x128xf32, #tpu.memory_space<vmem>>, vector<1x128xf32>
    %3 = arith.truncf %0 : vector<16x128xf32> to vector<16x128xbf16>
    %cst = arith.constant dense<0.000000e+00> : vector<16x128xf32>
    %4 = tpu.matmul %3, %1, %cst {dimension_numbers = #tpu.dot_dimension_numbers<[1], [0], [0], [1], [0, 0, 1, 1], [], []>} : vector<16x128xbf16>, vector<128x128xbf16>, vector<16x128xf32> -> vector<16x128xf32>
    %5 = vector.broadcast %2 : vector<1x128xf32> to vector<16x128xf32>
    %6 = arith.addf %4, %5 : vector<16x128xf32>
    %cst_5 = arith.constant 0.000000e+00 : f32
    %7 = vector.broadcast %cst_5 : f32 to vector<16x128xf32>
    %8 = arith.maximumf %6, %7 : vector<16x128xf32>
    %c0_6 = arith.constant 0 : index
    %c0_7 = arith.constant 0 : index
    %9 = vector.load %arg4[%c0_6, %c0_7] : memref<128x128xbf16, #tpu.memory_space<vmem>>, vector<128x128xbf16>
    %c0_8 = arith.constant 0 : index
    %c0_9 = arith.constant 0 : index
    %10 = vector.load %arg5[%c0_8, %c0_9] : memref<1x128xf32, #tpu.memory_space<vmem>>, vector<1x128xf32>
    %11 = arith.truncf %8 : vector<16x128xf32> to vector<16x128xbf16>
    %cst_10 = arith.constant dense<0.000000e+00> : vector<16x128xf32>
    %12 = tpu.matmul %11, %9, %cst_10 {dimension_numbers = #tpu.dot_dimension_numbers<[1], [0], [0], [1], [0, 0, 1, 1], [], []>} : vector<16x128xbf16>, vector<128x128xbf16>, vector<16x128xf32> -> vector<16x128xf32>
    %13 = vector.broadcast %10 : vector<1x128xf32> to vector<16x128xf32>
    %14 = arith.addf %12, %13 : vector<16x128xf32>
    %cst_11 = arith.constant 0.000000e+00 : f32
    %15 = vector.broadcast %cst_11 : f32 to vector<16x128xf32>
    %16 = arith.maximumf %14, %15 : vector<16x128xf32>
    %c0_12 = arith.constant 0 : index
    %c0_13 = arith.constant 0 : index
    %17 = vector.load %arg6[%c0_12, %c0_13] : memref<128x128xbf16, #tpu.memory_space<vmem>>, vector<128x128xbf16>
    %c0_14 = arith.constant 0 : index
    %c0_15 = arith.constant 0 : index
    %18 = vector.load %arg7[%c0_14, %c0_15] : memref<1x128xf32, #tpu.memory_space<vmem>>, vector<1x128xf32>
    %19 = arith.truncf %16 : vector<16x128xf32> to vector<16x128xbf16>
    %cst_16 = arith.constant dense<0.000000e+00> : vector<16x128xf32>
    %20 = tpu.matmul %19, %17, %cst_16 {dimension_numbers = #tpu.dot_dimension_numbers<[1], [0], [0], [1], [0, 0, 1, 1], [], []>} : vector<16x128xbf16>, vector<128x128xbf16>, vector<16x128xf32> -> vector<16x128xf32>
    %21 = vector.broadcast %18 : vector<1x128xf32> to vector<16x128xf32>
    %22 = arith.addf %20, %21 : vector<16x128xf32>
    %23 = math.tanh %22 : vector<16x128xf32>
    %cst_17 = arith.constant 1.000000e+00 : f32
    %24 = vector.broadcast %cst_17 : f32 to vector<16x128xf32>
    %25 = arith.mulf %24, %23 : vector<16x128xf32>
    %c0_18 = arith.constant 0 : index
    %c0_19 = arith.constant 0 : index
    %26 = vector.load %arg8[%c0_18, %c0_19] : memref<16x128xf32, #tpu.memory_space<vmem>>, vector<16x128xf32>
    tpu.vector_store %arg8[%c0_18, %c0_19], %25 {strides = array<i32>} : memref<16x128xf32, #tpu.memory_space<vmem>>, vector<16x128xf32>,
    return
  }
  func.func @transform_0(%arg0: i32) -> (i32, i32) {
    %c0_i32 = arith.constant 0 : i32
    %c0_i32_0 = arith.constant 0 : i32
    return %arg0, %c0_i32 : i32, i32
  }
  func.func @transform_1(%arg0: i32) -> (i32, i32) {
    %c0_i32 = arith.constant 0 : i32
    %c0_i32_0 = arith.constant 0 : i32
    %c0_i32_1 = arith.constant 0 : i32
    return %c0_i32, %c0_i32_0 : i32, i32
  }
  func.func @transform_2(%arg0: i32) -> (i32, i32) {
    %c0_i32 = arith.constant 0 : i32
    %c0_i32_0 = arith.constant 0 : i32
    %c0_i32_1 = arith.constant 0 : i32
    return %c0_i32, %c0_i32_0 : i32, i32
  }
  func.func @transform_3(%arg0: i32) -> (i32, i32) {
    %c0_i32 = arith.constant 0 : i32
    %c0_i32_0 = arith.constant 0 : i32
    %c0_i32_1 = arith.constant 0 : i32
    return %c0_i32, %c0_i32_0 : i32, i32
  }
  func.func @transform_4(%arg0: i32) -> (i32, i32) {
    %c0_i32 = arith.constant 0 : i32
    %c0_i32_0 = arith.constant 0 : i32
    %c0_i32_1 = arith.constant 0 : i32
    return %c0_i32, %c0_i32_0 : i32, i32
  }
  func.func @transform_5(%arg0: i32) -> (i32, i32) {
    %c0_i32 = arith.constant 0 : i32
    %c0_i32_0 = arith.constant 0 : i32
    %c0_i32_1 = arith.constant 0 : i32
    return %c0_i32, %c0_i32_0 : i32, i32
  }
  func.func @transform_6(%arg0: i32) -> (i32, i32) {
    %c0_i32 = arith.constant 0 : i32
    %c0_i32_0 = arith.constant 0 : i32
    %c0_i32_1 = arith.constant 0 : i32
    return %c0_i32, %c0_i32_0 : i32, i32
  }
  func.func @transform_7(%arg0: i32) -> (i32, i32) {
    %c0_i32 = arith.constant 0 : i32
    %c0_i32_0 = arith.constant 0 : i32
    return %arg0, %c0_i32 : i32, i32
  }
}

</mosaic_0001>

<llo_original>
// kernel: tpu_custom_call.1
$region0: #{tpu_custom_call.1}
  #allocation0 [shape = 'u32[]', space=smem, size = 0x4, offset = 0x4, fixed_abs, tag = 'smem constant byte address 0x4 - core index']
  #allocation1 [shape = 'u32[144,128]{1,0:T(1,128)}', space=vmem, size = 0x12000, scoped, tag = 'internal scratch']
  %s0 = inlined_call_operand.hbm [shape: f32[64,128], index: 0, kind: input, shape index: {}]
  %s1 = inlined_call_operand.hbm [shape: bf16[128,128], index: 1, kind: input, shape index: {}]
  %s2 = inlined_call_operand.vmem [shape: f32[1,128], index: 2, kind: input, shape index: {}]
  %s3 = inlined_call_operand.hbm [shape: bf16[128,128], index: 3, kind: input, shape index: {}]
  %s4 = inlined_call_operand.vmem [shape: f32[1,128], index: 4, kind: input, shape index: {}]
  %s5 = inlined_call_operand.hbm [shape: bf16[128,128], index: 5, kind: input, shape index: {}]
  %s6 = inlined_call_operand.vmem [shape: f32[1,128], index: 6, kind: input, shape index: {}]
  %s7 = inlined_call_operand.hbm [shape: f32[64,128], index: 7, kind: output, shape index: {}]
  %s8 = sld [smem:[#allocation0]]
  $region77: #{tpu_custom_call.1} parent=0
    _
  %s10 = ssub.s32 1, %s8
  %s11 = scalar_select 0, %s10, %s8
  $region1: #{tpu_custom_call.1} parent=0
    #allocation2 [shape = 'u8[16384]{0}', space=vmem, size = 0x4000, scoped, tag = 'input window, operand 0']
    #allocation3 [shape = 's32[2]{0}', space=sflag, size = 0x8, scoped, tag = 'scoped memory for tpu_custom_call.1']
    #allocation4 [shape = 's32[2]{0}', space=sflag, size = 0x8, scoped, tag = 'scoped memory for tpu_custom_call.1']
    #allocation5 [shape = 'u8[32768]{0}', space=vmem, size = 0x8000, scoped, tag = 'input window, operand 1, single buffered']
    #allocation6 [shape = 's32[1]{0}', space=sflag, size = 0x4, scoped, tag = 'scoped memory for tpu_custom_call.1']
    #allocation7 [shape = 'u8[32768]{0}', space=vmem, size = 0x8000, scoped, tag = 'input window, operand 3, single buffered']
    #allocation8 [shape = 'u8[32768]{0}', space=vmem, size = 0x8000, scoped, tag = 'input window, operand 5, single buffered']
    #allocation9 [shape = 's32[1]{0}', space=sflag, size = 0x4, scoped, tag = 'scoped memory for tpu_custom_call.1']
    #allocation10 [shape = 'u8[16384]{0}', space=vmem, size = 0x4000, scoped, tag = 'output window, operand 0']
    %12 = vsyncpa [#allocation3], 0
    %s13 = scalar_lea.sflag [#allocation3], 1
    %14 = vsyncpa %s13, 0
    %15 = vsyncpa [#allocation6], 0
    %16 = vsyncpa [#allocation9], 0
    %17 = vsyncpa [#allocation4], 0
    %s18 = scalar_lea.sflag [#allocation4], 1
    %19 = vsyncpa %s18, 0
    loop: start=0, step=1, limit=6
    $region2: #{tpu_custom_call.1} parent=1 // loop_pre_header
      _
    $region3: #{tpu_custom_call.1} parent=1 // loop_header
      %s21 = sphi 0, %s25
      %p22 = scmp.ge.s32.totalorder %s21, 6
      %s31 = sphi 0, %s33
      %s34 = sphi 0, %s31
      %s35 = sphi 0, %s34
      %s51 = sphi 0, %s35
      %s55 = sphi 0, %s55
      %s57 = sphi 0, %s55
      %s58 = sphi 0, %s57
      %s72 = sphi 0, %s58
      %s76 = sphi 0, %s76
      %s78 = sphi 0, %s76
      %s79 = sphi 0, %s78
      %s93 = sphi 0, %s79
      %s97 = sphi 0, %s97
      %s99 = sphi 0, %s97
      %s100 = sphi 0, %s99
      %s114 = sphi 0, %s100
      %s118 = sphi 0, %s118
      %s120 = sphi 0, %s118
      %s121 = sphi 0, %s120
      %s135 = sphi 0, %s121
      %s139 = sphi 0, %s139
      %s141 = sphi 0, %s139
      %s142 = sphi 0, %s141
      %s156 = sphi 0, %s142
      %s160 = sphi 0, %s160
      %s162 = sphi 0, %s160
      %s163 = sphi 0, %s162
      %s177 = sphi 0, %s163
      %s183 = sphi 0, %s185
      %s186 = sphi 0, %s183
      %s187 = sphi 0, %s186
      %s203 = sphi 0, %s187
    $region4: #{tpu_custom_call.1} parent=1 // loop_header_branch
      %24 = sbr.rel (%p22) target = $region8
    $region5: #{tpu_custom_call.1} parent=1 // loop_body
      %s26 = ssub.s32 %s21, 1
      %s27 = ssub.s32 %s21, 2
      %s28 = sadd.s32 %s21, 1
      %s29 = ssub.s32 %s21, %s28
      %p30 = scmp.eq.s32.totalorder %s29, 0
      %s32 = sadd.s32 %s31, 1
      %s33 = scalar_select %p30, %s31, %s32
      %p36 = pneg %p30
      %p37 = scmp.eq.s32.totalorder %s21, 3
      %p38 = por %p36, %p37
      %p39 = scmp.ne.s32.totalorder %s31, %s34
      %p40 = scmp.eq.s32.totalorder %s21, 0
      %p41 = por %p39, %p40
      %p42 = scmp.ne.s32.totalorder %s31, %s34
      %p43 = scmp.eq.s32.totalorder %s26, 3
      %p44 = por %p42, %p43
      %p45 = scmp.ne.s32.totalorder %s34, %s35
      %p46 = scmp.eq.s32.totalorder %s26, 0
      %p47 = por %p45, %p46
      %p48 = scmp.ne.s32.totalorder %s34, %s35
      %p49 = scmp.eq.s32.totalorder %s27, 3
      %p50 = por %p48, %p49
      %p52 = scmp.ne.s32.totalorder %s35, %s51
      %p53 = scmp.eq.s32.totalorder %s27, 0
      %p54 = por %p52, %p53
      %s56 = sadd.s32 %s55, 1
      %p59 = scmp.eq.s32.totalorder %s21, 3
      %p60 = scmp.ne.s32.totalorder %s55, %s57
      %p61 = scmp.eq.s32.totalorder %s21, 0
      %p62 = por %p60, %p61
      %p63 = scmp.ne.s32.totalorder %s55, %s57
      %p64 = scmp.eq.s32.totalorder %s26, 3
      %p65 = por %p63, %p64
      %p66 = scmp.ne.s32.totalorder %s57, %s58
      %p67 = scmp.eq.s32.totalorder %s26, 0
      %p68 = por %p66, %p67
      %p69 = scmp.ne.s32.totalorder %s57, %s58
      %p70 = scmp.eq.s32.totalorder %s27, 3
      %p71 = por %p69, %p70
      %p73 = scmp.ne.s32.totalorder %s58, %s72
      %p74 = scmp.eq.s32.totalorder %s27, 0
      %p75 = por %p73, %p74
      %s77 = sadd.s32 %s76, 1
      %p80 = scmp.eq.s32.totalorder %s21, 3
      %p81 = scmp.ne.s32.totalorder %s76, %s78
      %p82 = scmp.eq.s32.totalorder %s21, 0
      %p83 = por %p81, %p82
      %p84 = scmp.ne.s32.totalorder %s76, %s78
      %p85 = scmp.eq.s32.totalorder %s26, 3
      %p86 = por %p84, %p85
      %p87 = scmp.ne.s32.totalorder %s78, %s79
      %p88 = scmp.eq.s32.totalorder %s26, 0
      %p89 = por %p87, %p88
      %p90 = scmp.ne.s32.totalorder %s78, %s79
      %p91 = scmp.eq.s32.totalorder %s27, 3
      %p92 = por %p90, %p91
      %p94 = scmp.ne.s32.totalorder %s79, %s93
      %p95 = scmp.eq.s32.totalorder %s27, 0
      %p96 = por %p94, %p95
      %s98 = sadd.s32 %s97, 1
      %p101 = scmp.eq.s32.totalorder %s21, 3
      %p102 = scmp.ne.s32.totalorder %s97, %s99
      %p103 = scmp.eq.s32.totalorder %s21, 0
      %p104 = por %p102, %p103
      %p105 = scmp.ne.s32.totalorder %s97, %s99
      %p106 = scmp.eq.s32.totalorder %s26, 3
      %p107 = por %p105, %p106
      %p108 = scmp.ne.s32.totalorder %s99, %s100
      %p109 = scmp.eq.s32.totalorder %s26, 0
      %p110 = por %p108, %p109
      %p111 = scmp.ne.s32.totalorder %s99, %s100
      %p112 = scmp.eq.s32.totalorder %s27, 3
      %p113 = por %p111, %p112
      %p115 = scmp.ne.s32.totalorder %s100, %s114
      %p116 = scmp.eq.s32.totalorder %s27, 0
      %p117 = por %p115, %p116
      %s119 = sadd.s32 %s118, 1
      %p122 = scmp.eq.s32.totalorder %s21, 3
      %p123 = scmp.ne.s32.totalorder %s118, %s120
      %p124 = scmp.eq.s32.totalorder %s21, 0
      %p125 = por %p123, %p124
      %p126 = scmp.ne.s32.totalorder %s118, %s120
      %p127 = scmp.eq.s32.totalorder %s26, 3
      %p128 = por %p126, %p127
      %p129 = scmp.ne.s32.totalorder %s120, %s121
      %p130 = scmp.eq.s32.totalorder %s26, 0
      %p131 = por %p129, %p130
      %p132 = scmp.ne.s32.totalorder %s120, %s121
      %p133 = scmp.eq.s32.totalorder %s27, 3
      %p134 = por %p132, %p133
      %p136 = scmp.ne.s32.totalorder %s121, %s135
      %p137 = scmp.eq.s32.totalorder %s27, 0
      %p138 = por %p136, %p137
      %s140 = sadd.s32 %s139, 1
      %p143 = scmp.eq.s32.totalorder %s21, 3
      %p144 = scmp.ne.s32.totalorder %s139, %s141
      %p145 = scmp.eq.s32.totalorder %s21, 0
      %p146 = por %p144, %p145
      %p147 = scmp.ne.s32.totalorder %s139, %s141
      %p148 = scmp.eq.s32.totalorder %s26, 3
      %p149 = por %p147, %p148
      %p150 = scmp.ne.s32.totalorder %s141, %s142
      %p151 = scmp.eq.s32.totalorder %s26, 0
      %p152 = por %p150, %p151
      %p153 = scmp.ne.s32.totalorder %s141, %s142
      %p154 = scmp.eq.s32.totalorder %s27, 3
      %p155 = por %p153, %p154
      %p157 = scmp.ne.s32.totalorder %s142, %s156
      %p158 = scmp.eq.s32.totalorder %s27, 0
      %p159 = por %p157, %p158
      %s161 = sadd.s32 %s160, 1
      %p164 = scmp.eq.s32.totalorder %s21, 3
      %p165 = scmp.ne.s32.totalorder %s160, %s162
      %p166 = scmp.eq.s32.totalorder %s21, 0
      %p167 = por %p165, %p166
      %p168 = scmp.ne.s32.totalorder %s160, %s162
      %p169 = scmp.eq.s32.totalorder %s26, 3
      %p170 = por %p168, %p169
      %p171 = scmp.ne.s32.totalorder %s162, %s163
      %p172 = scmp.eq.s32.totalorder %s26, 0
      %p173 = por %p171, %p172
      %p174 = scmp.ne.s32.totalorder %s162, %s163
      %p175 = scmp.eq.s32.totalorder %s27, 3
      %p176 = por %p174, %p175
      %p178 = scmp.ne.s32.totalorder %s163, %s177
      %p179 = scmp.eq.s32.totalorder %s27, 0
      %p180 = por %p178, %p179
      %s181 = ssub.s32 %s21, %s28
      %p182 = scmp.eq.s32.totalorder %s181, 0
      %s184 = sadd.s32 %s183, 1
      %s185 = scalar_select %p182, %s183, %s184
      %p188 = pneg %p182
      %p189 = scmp.eq.s32.totalorder %s21, 3
      %p190 = por %p188, %p189
      %p191 = scmp.ne.s32.totalorder %s183, %s186
      %p192 = scmp.eq.s32.totalorder %s21, 0
      %p193 = por %p191, %p192
      %p194 = scmp.ne.s32.totalorder %s183, %s186
      %p195 = scmp.eq.s32.totalorder %s26, 3
      %p196 = por %p194, %p195
      %p197 = scmp.ne.s32.totalorder %s186, %s187
      %p198 = scmp.eq.s32.totalorder %s26, 0
      %p199 = por %p197, %p198
      %p200 = scmp.ne.s32.totalorder %s186, %s187
      %p201 = scmp.eq.s32.totalorder %s27, 3
      %p202 = por %p200, %p201
      %p204 = scmp.ne.s32.totalorder %s187, %s203
      %p205 = scmp.eq.s32.totalorder %s27, 0
      %p206 = por %p204, %p205
      %p207 = scmp.le.s32.totalorder 1, %s21
      %p208 = scmp.lt.s32.totalorder %s21, 5
      %p209 = pnand %p207, %p208
      %p210 = pneg %p209
      // Predicated region
      $region9: #{tpu_custom_call.1} parent=5 // pred_check
        _
      $region10: #{tpu_custom_call.1} parent=5 // pred_check_branch
        %212 = sbr.rel (%p209) target = $region12
      $region11: #{tpu_custom_call.1} parent=5 // pred_region
        %s213 = ssub.s32 %s21, 1
        // Predicated region
        $region13: #{tpu_custom_call.1} parent=11 // pred_check
          %p214 = pneg %p68
        $region14: #{tpu_custom_call.1} parent=11 // pred_check_branch
          %216 = sbr.rel (%p214) target = $region16
        $region15: #{tpu_custom_call.1} parent=11 // pred_region
          %s218 = ssub.s32 1024, 1024
          %219 = vsyncadd [#allocation6], %s218
          %s220 = sshll.u32 [#allocation5], 4
          %s221 = int_to_ptr.vmem [resolvable:$true] %s220
          %226 = dma.hbm_to_vmem [thread:$0]  %s1, 1024, %s221, [#allocation6], 64, 64, 4
        $region16: #{tpu_custom_call.1} parent=11 // pred_fallthru
          _
        // Predicated region
        $region17: #{tpu_custom_call.1} parent=11 // pred_check
          %p227 = pneg %p89
        $region18: #{tpu_custom_call.1} parent=11 // pred_check_branch
          %229 = sbr.rel (%p227) target = $region20
        $region19: #{tpu_custom_call.1} parent=11 // pred_region
          _
        $region20: #{tpu_custom_call.1} parent=11 // pred_fallthru
          _
        // Predicated region
        $region21: #{tpu_custom_call.1} parent=11 // pred_check
          %p230 = pneg %p110
        $region22: #{tpu_custom_call.1} parent=11 // pred_check_branch
          %232 = sbr.rel (%p230) target = $region24
        $region23: #{tpu_custom_call.1} parent=11 // pred_region
          %s234 = ssub.s32 1024, 1024
          %235 = vsyncadd [#allocation6], %s234
          %s236 = sshll.u32 [#allocation7], 4
          %s237 = int_to_ptr.vmem [resolvable:$true] %s236
          %242 = dma.hbm_to_vmem [thread:$0]  %s3, 1024, %s237, [#allocation6], 64, 64, 4
        $region24: #{tpu_custom_call.1} parent=11 // pred_fallthru
          _
        // Predicated region
        $region25: #{tpu_custom_call.1} parent=11 // pred_check
          %p243 = pneg %p131
        $region26: #{tpu_custom_call.1} parent=11 // pred_check_branch
          %245 = sbr.rel (%p243) target = $region28
        $region27: #{tpu_custom_call.1} parent=11 // pred_region
          _
        $region28: #{tpu_custom_call.1} parent=11 // pred_fallthru
          _
        // Predicated region
        $region29: #{tpu_custom_call.1} parent=11 // pred_check
          %p246 = pneg %p152
        $region30: #{tpu_custom_call.1} parent=11 // pred_check_branch
          %248 = sbr.rel (%p246) target = $region32
        $region31: #{tpu_custom_call.1} parent=11 // pred_region
          %s250 = ssub.s32 1024, 1024
          %251 = vsyncadd [#allocation9], %s250
          %s252 = sshll.u32 [#allocation8], 4
          %s253 = int_to_ptr.vmem [resolvable:$true] %s252
          %258 = dma.hbm_to_vmem [thread:$0]  %s5, 1024, %s253, [#allocation9], 64, 64, 4
        $region32: #{tpu_custom_call.1} parent=11 // pred_fallthru
          _
        // Predicated region
        $region33: #{tpu_custom_call.1} parent=11 // pred_check
          %p259 = pneg %p173
        $region34: #{tpu_custom_call.1} parent=11 // pred_check_branch
          %261 = sbr.rel (%p259) target = $region36
        $region35: #{tpu_custom_call.1} parent=11 // pred_region
          _
        $region36: #{tpu_custom_call.1} parent=11 // pred_fallthru
          _
      $region12: #{tpu_custom_call.1} parent=5 // pred_fallthru
        _
      %p262 = scmp.lt.s32.totalorder %s21, 4
      // Predicated region
      $region37: #{tpu_custom_call.1} parent=5 // pred_check
        %p263 = pneg %p262
      $region38: #{tpu_custom_call.1} parent=5 // pred_check_branch
        %265 = sbr.rel (%p263) target = $region40
      $region39: #{tpu_custom_call.1} parent=5 // pred_region
        // Predicated region
        $region41: #{tpu_custom_call.1} parent=39 // pred_check
          %p266 = pneg %p41
        $region42: #{tpu_custom_call.1} parent=39 // pred_check_branch
          %268 = sbr.rel (%p266) target = $region44
        $region43: #{tpu_custom_call.1} parent=39 // pred_region
          %s269 = sand.u32 %s31, 1
          %s270 = scalar_lea.sflag [#allocation3], %s269
          %s271 = sand.u32 %s31, 1
          %s272 = smul.addr %s271, 16
          %s273 = scalar_lea.vmem [#allocation2], %s272
          %s274 = smul.u32 2, %s21
          %s276 = ssub.s32 256, 256
          %277 = vsyncadd %s270, %s276
          %s278 = smul.addr %s274, 128
          %s279 = scalar_lea.hbm %s0, %s278
          %s280 = sshll.u32 %s273, 4
          %s281 = int_to_ptr.vmem [resolvable:$true] %s280
          %286 = dma.hbm_to_vmem [thread:$0]  %s279, 256, %s281, %s270, 128, 128, 8
        $region44: #{tpu_custom_call.1} parent=39 // pred_fallthru
          _
      $region40: #{tpu_custom_call.1} parent=5 // pred_fallthru
        _
      %p287 = scmp.le.s32.totalorder 1, %s21
      %p288 = scmp.lt.s32.totalorder %s21, 5
      %p289 = pnand %p287, %p288
      %p290 = pneg %p289
      // Predicated region
      $region45: #{tpu_custom_call.1} parent=5 // pred_check
        _
      $region46: #{tpu_custom_call.1} parent=5 // pred_check_branch
        %292 = sbr.rel (%p289) target = $region48
      $region47: #{tpu_custom_call.1} parent=5 // pred_region
        %s293 = ssub.s32 %s21, 1
        %s294 = sand.u32 %s34, 1
        %s295 = scalar_lea.sflag [#allocation3], %s294
        %s296 = sand.u32 %s34, 1
        %s297 = smul.addr %s296, 16
        %s298 = scalar_lea.vmem [#allocation2], %s297
        // Predicated region
        $region49: #{tpu_custom_call.1} parent=47 // pred_check
          %p299 = pneg %p47
        $region50: #{tpu_custom_call.1} parent=47 // pred_check_branch
          %301 = sbr.rel (%p299) target = $region52
        $region51: #{tpu_custom_call.1} parent=47 // pred_region
          %302 = dma.done %s295, 256
        $region52: #{tpu_custom_call.1} parent=47 // pred_fallthru
          _
        // Predicated region
        $region53: #{tpu_custom_call.1} parent=47 // pred_check
          %p303 = pneg %p68
        $region54: #{tpu_custom_call.1} parent=47 // pred_check_branch
          %305 = sbr.rel (%p303) target = $region56
        $region55: #{tpu_custom_call.1} parent=47 // pred_region
          %306 = dma.done [#allocation6], 1024
        $region56: #{tpu_custom_call.1} parent=47 // pred_fallthru
          _
        // Predicated region
        $region57: #{tpu_custom_call.1} parent=47 // pred_check
          %p307 = pneg %p110
        $region58: #{tpu_custom_call.1} parent=47 // pred_check_branch
          %309 = sbr.rel (%p307) target = $region60
        $region59: #{tpu_custom_call.1} parent=47 // pred_region
          %310 = dma.done [#allocation6], 1024
        $region60: #{tpu_custom_call.1} parent=47 // pred_fallthru
          _
        // Predicated region
        $region61: #{tpu_custom_call.1} parent=47 // pred_check
          %p311 = pneg %p152
        $region62: #{tpu_custom_call.1} parent=47 // pred_check_branch
          %313 = sbr.rel (%p311) target = $region64
        $region63: #{tpu_custom_call.1} parent=47 // pred_region
          %314 = dma.done [#allocation9], 1024
        $region64: #{tpu_custom_call.1} parent=47 // pred_fallthru
          _
        %s315 = sand.u32 %s34, 1
        %s316 = scalar_lea.sflag [#allocation3], %s315
        %s317 = sand.u32 %s34, 1
        %s318 = smul.addr %s317, 16
        %s319 = scalar_lea.vmem [#allocation2], %s318
        %p320 = pneg %p47
        %p321 = pneg %p44
        %p322 = pneg %p68
        %p323 = pneg %p65
        %p324 = pneg %p89
        %p325 = pneg %p86
        %p326 = pneg %p110
        %p327 = pneg %p107
        %p328 = pneg %p131
        %p329 = pneg %p128
        %p330 = pneg %p152
        %p331 = pneg %p149
        %p332 = pneg %p173
        %p333 = pneg %p170
        %p334 = pneg %p199
        %p335 = pneg %p196
        %s336 = sand.u32 %s186, 1
        %s337 = scalar_lea.sflag [#allocation4], %s336
        %s338 = sand.u32 %s186, 1
        %s339 = smul.addr %s338, 16
        %s340 = scalar_lea.vmem [#allocation10], %s339
        %s341 = smul.u32 2, %s26
        %s342 = smul.u32 2, %s26
        %v344 = vld [vmem:[%s298] sm:$0xff]
        %v345 = vld [vmem:[%s298 + $0x8] sm:$0xff]
        %v346 = vld [vmem:[#allocation5] sm:$0xf]
        %v347 = vld [vmem:[#allocation5 + $0x4] sm:$0xf]
        %v348 = vld [vmem:[#allocation5 + $0x8] sm:$0xf]
        %v349 = vld [vmem:[#allocation5 + $0xc] sm:$0xf]
        %v350 = vld [vmem:[#allocation5 + $0x10] sm:$0xf]
        %v351 = vld [vmem:[#allocation5 + $0x14] sm:$0xf]
        %v352 = vld [vmem:[#allocation5 + $0x18] sm:$0xf]
        %v353 = vld [vmem:[#allocation5 + $0x1c] sm:$0xf]
        %v354 = vld [vmem:[#allocation5 + $0x20] sm:$0xf]
        %v355 = vld [vmem:[#allocation5 + $0x24] sm:$0xf]
        %v356 = vld [vmem:[#allocation5 + $0x28] sm:$0xf]
        %v357 = vld [vmem:[#allocation5 + $0x2c] sm:$0xf]
        %v358 = vld [vmem:[#allocation5 + $0x30] sm:$0xf]
        %v359 = vld [vmem:[#allocation5 + $0x34] sm:$0xf]
        %v360 = vld [vmem:[#allocation5 + $0x38] sm:$0xf]
        %v361 = vld [vmem:[#allocation5 + $0x3c] sm:$0xf]
        %v362 = vld [vmem:[%s2] sm:$0x1]
        %v363 = vpack.c.bf16 %v345, %v344
        %v365 = vlaneseq
        %v366 = vshrl.u32 %v365, 7
        %v367 = vsub.s32 0, %v366
        %v368 = vrot.slane %v362, %v367
        %v386 = vunpack.c.l.b16 %v346
        %v387 = vunpack.c.l.b16 %v347
        %v388 = vunpack.c.l.b16 %v348
        %v389 = vunpack.c.l.b16 %v349
        %v390 = vunpack.c.l.b16 %v350
        %v391 = vunpack.c.l.b16 %v351
        %v392 = vunpack.c.l.b16 %v352
        %v393 = vunpack.c.l.b16 %v353
        %v394 = vunpack.c.l.b16 %v354
        %v395 = vunpack.c.l.b16 %v355
        %v396 = vunpack.c.l.b16 %v356
        %v397 = vunpack.c.l.b16 %v357
        %v398 = vunpack.c.l.b16 %v358
        %v399 = vunpack.c.l.b16 %v359
        %v400 = vunpack.c.l.b16 %v360
        %v401 = vunpack.c.l.b16 %v361
        %v402 = vpack.c.b16 %v387, %v386
        %v403 = vpack.c.b16 %v389, %v388
        %v404 = vpack.c.b16 %v391, %v390
        %v405 = vpack.c.b16 %v393, %v392
        %v406 = vpack.c.b16 %v395, %v394
        %v407 = vpack.c.b16 %v397, %v396
        %v408 = vpack.c.b16 %v399, %v398
        %v409 = vpack.c.b16 %v401, %v400
        %418 = vmatprep.subr.bf16.mxu0 0
        %419 = vmatpush1.bf16.msra.mxu0 %v402
        %420 = vmatprep.subr.bf16.mxu0 0
        %421 = vmatpush1.bf16.msra.mxu0 %v403
        %422 = vmatprep.subr.bf16.mxu0 0
        %423 = vmatpush1.bf16.msra.mxu0 %v404
        %424 = vmatprep.subr.bf16.mxu0 0
        %425 = vmatpush1.bf16.msra.mxu0 %v405
        %426 = vmatprep.subr.bf16.mxu0 0
        %427 = vmatpush1.bf16.msra.mxu0 %v406
        %428 = vmatprep.subr.bf16.mxu0 0
        %429 = vmatpush1.bf16.msra.mxu0 %v407
        %430 = vmatprep.subr.bf16.mxu0 0
        %431 = vmatpush1.bf16.msra.mxu0 %v408
        %432 = vmatprep.subr.bf16.mxu0 0
        %433 = vmatpush1.bf16.msra.mxu0 %v409
        %434 = vmatprep.subr.bf16.mxu0 0
        %435 = vmatpush1.bf16.msra.mxu0 0
        %436 = vmatprep.subr.bf16.mxu0 0
        %437 = vmatpush1.bf16.msra.mxu0 0
        %438 = vmatprep.subr.bf16.mxu0 0
        %439 = vmatpush1.bf16.msra.mxu0 0
        %440 = vmatprep.subr.bf16.mxu0 0
        %441 = vmatpush1.bf16.msra.mxu0 0
        %442 = vmatprep.subr.bf16.mxu0 0
        %443 = vmatpush1.bf16.msra.mxu0 0
        %444 = vmatprep.subr.bf16.mxu0 0
        %445 = vmatpush1.bf16.msra.mxu0 0
        %446 = vmatprep.subr.bf16.mxu0 0
        %447 = vmatpush1.bf16.msra.mxu0 0
        %448 = vmatprep.subr.bf16.mxu0 0
        %449 = vmatpush1.bf16.msra.mxu0 0
        %450 = vmatprep.mubr.bf16.mxu0 0
        %451 = vmatmul.mubr.bf16.gmra.mrb[0].mxu0 %v363
        %v452 = vpop.f32.mrb[0].mxu0
        %v453 = vadd.f32 %v368, %v452
        %v454 = vpop.f32.mrb[0].mxu0
        %v455 = vpop.f32.mrb[0].mxu0
        %v456 = vadd.f32 %v368, %v455
        %v457 = vpop.f32.mrb[0].mxu0
        %458 = vdwg.mxu0
        %v459 = vmax.f32 %v453, 0.0
        %v460 = vmax.f32 %v456, 0.0
        %v461 = vld [vmem:[#allocation7] sm:$0xf]
        %v462 = vld [vmem:[#allocation7 + $0x4] sm:$0xf]
        %v463 = vld [vmem:[#allocation7 + $0x8] sm:$0xf]
        %v464 = vld [vmem:[#allocation7 + $0xc] sm:$0xf]
        %v465 = vld [vmem:[#allocation7 + $0x10] sm:$0xf]
        %v466 = vld [vmem:[#allocation7 + $0x14] sm:$0xf]
        %v467 = vld [vmem:[#allocation7 + $0x18] sm:$0xf]
        %v468 = vld [vmem:[#allocation7 + $0x1c] sm:$0xf]
        %v469 = vld [vmem:[#allocation7 + $0x20] sm:$0xf]
        %v470 = vld [vmem:[#allocation7 + $0x24] sm:$0xf]
        %v471 = vld [vmem:[#allocation7 + $0x28] sm:$0xf]
        %v472 = vld [vmem:[#allocation7 + $0x2c] sm:$0xf]
        %v473 = vld [vmem:[#allocation7 + $0x30] sm:$0xf]
        %v474 = vld [vmem:[#allocation7 + $0x34] sm:$0xf]
        %v475 = vld [vmem:[#allocation7 + $0x38] sm:$0xf]
        %v476 = vld [vmem:[#allocation7 + $0x3c] sm:$0xf]
        %v477 = vld [vmem:[%s4] sm:$0x1]
        %v478 = vpack.c.bf16 %v460, %v459
        %v480 = vlaneseq
        %v481 = vshrl.u32 %v480, 7
        %v482 = vsub.s32 0, %v481
        %v483 = vrot.slane %v477, %v482
        %v501 = vunpack.c.l.b16 %v461
        %v502 = vunpack.c.l.b16 %v462
        %v503 = vunpack.c.l.b16 %v463
        %v504 = vunpack.c.l.b16 %v464
        %v505 = vunpack.c.l.b16 %v465
        %v506 = vunpack.c.l.b16 %v466
        %v507 = vunpack.c.l.b16 %v467
        %v508 = vunpack.c.l.b16 %v468
        %v509 = vunpack.c.l.b16 %v469
        %v510 = vunpack.c.l.b16 %v470
        %v511 = vunpack.c.l.b16 %v471
        %v512 = vunpack.c.l.b16 %v472
        %v513 = vunpack.c.l.b16 %v473
        %v514 = vunpack.c.l.b16 %v474
        %v515 = vunpack.c.l.b16 %v475
        %v516 = vunpack.c.l.b16 %v476
        %v517 = vpack.c.b16 %v502, %v501
        %v518 = vpack.c.b16 %v504, %v503
        %v519 = vpack.c.b16 %v506, %v505
        %v520 = vpack.c.b16 %v508, %v507
        %v521 = vpack.c.b16 %v510, %v509
        %v522 = vpack.c.b16 %v512, %v511
        %v523 = vpack.c.b16 %v514, %v513
        %v524 = vpack.c.b16 %v516, %v515
        %533 = vmatprep.subr.bf16.mxu0 0
        %534 = vmatpush1.bf16.msra.mxu0 %v517
        %535 = vmatprep.subr.bf16.mxu0 0
        %536 = vmatpush1.bf16.msra.mxu0 %v518
        %537 = vmatprep.subr.bf16.mxu0 0
        %538 = vmatpush1.bf16.msra.mxu0 %v519
        %539 = vmatprep.subr.bf16.mxu0 0
        %540 = vmatpush1.bf16.msra.mxu0 %v520
        %541 = vmatprep.subr.bf16.mxu0 0
        %542 = vmatpush1.bf16.msra.mxu0 %v521
        %543 = vmatprep.subr.bf16.mxu0 0
        %544 = vmatpush1.bf16.msra.mxu0 %v522
        %545 = vmatprep.subr.bf16.mxu0 0
        %546 = vmatpush1.bf16.msra.mxu0 %v523
        %547 = vmatprep.subr.bf16.mxu0 0
        %548 = vmatpush1.bf16.msra.mxu0 %v524
        %549 = vmatprep.subr.bf16.mxu0 0
        %550 = vmatpush1.bf16.msra.mxu0 0
        %551 = vmatprep.subr.bf16.mxu0 0
        %552 = vmatpush1.bf16.msra.mxu0 0
        %553 = vmatprep.subr.bf16.mxu0 0
        %554 = vmatpush1.bf16.msra.mxu0 0
        %555 = vmatprep.subr.bf16.mxu0 0
        %556 = vmatpush1.bf16.msra.mxu0 0
        %557 = vmatprep.subr.bf16.mxu0 0
        %558 = vmatpush1.bf16.msra.mxu0 0
        %559 = vmatprep.subr.bf16.mxu0 0
        %560 = vmatpush1.bf16.msra.mxu0 0
        %561 = vmatprep.subr.bf16.mxu0 0
        %562 = vmatpush1.bf16.msra.mxu0 0
        %563 = vmatprep.subr.bf16.mxu0 0
        %564 = vmatpush1.bf16.msra.mxu0 0
        %565 = vmatprep.mubr.bf16.mxu0 0
        %566 = vmatmul.mubr.bf16.gmra.mrb[0].mxu0 %v478
        %v567 = vpop.f32.mrb[0].mxu0
        %v568 = vadd.f32 %v483, %v567
        %v569 = vpop.f32.mrb[0].mxu0
        %v570 = vpop.f32.mrb[0].mxu0
        %v571 = vadd.f32 %v483, %v570
        %v572 = vpop.f32.mrb[0].mxu0
        %573 = vdwg.mxu0
        %v574 = vmax.f32 %v568, 0.0
        %v575 = vmax.f32 %v571, 0.0
        %v576 = vld [vmem:[#allocation8] sm:$0xf]
        %v577 = vld [vmem:[#allocation8 + $0x4] sm:$0xf]
        %v578 = vld [vmem:[#allocation8 + $0x8] sm:$0xf]
        %v579 = vld [vmem:[#allocation8 + $0xc] sm:$0xf]
        %v580 = vld [vmem:[#allocation8 + $0x10] sm:$0xf]
        %v581 = vld [vmem:[#allocation8 + $0x14] sm:$0xf]
        %v582 = vld [vmem:[#allocation8 + $0x18] sm:$0xf]
        %v583 = vld [vmem:[#allocation8 + $0x1c] sm:$0xf]
        %v584 = vld [vmem:[#allocation8 + $0x20] sm:$0xf]
        %v585 = vld [vmem:[#allocation8 + $0x24] sm:$0xf]
        %v586 = vld [vmem:[#allocation8 + $0x28] sm:$0xf]
        %v587 = vld [vmem:[#allocation8 + $0x2c] sm:$0xf]
        %v588 = vld [vmem:[#allocation8 + $0x30] sm:$0xf]
        %v589 = vld [vmem:[#allocation8 + $0x34] sm:$0xf]
        %v590 = vld [vmem:[#allocation8 + $0x38] sm:$0xf]
        %v591 = vld [vmem:[#allocation8 + $0x3c] sm:$0xf]
        %v592 = vld [vmem:[%s6] sm:$0x1]
        %v593 = vpack.c.bf16 %v575, %v574
        %v595 = vlaneseq
        %v596 = vshrl.u32 %v595, 7
        %v597 = vsub.s32 0, %v596
        %v598 = vrot.slane %v592, %v597
        %v616 = vunpack.c.l.b16 %v576
        %v617 = vunpack.c.l.b16 %v577
        %v618 = vunpack.c.l.b16 %v578
        %v619 = vunpack.c.l.b16 %v579
        %v620 = vunpack.c.l.b16 %v580
        %v621 = vunpack.c.l.b16 %v581
        %v622 = vunpack.c.l.b16 %v582
        %v623 = vunpack.c.l.b16 %v583
        %v624 = vunpack.c.l.b16 %v584
        %v625 = vunpack.c.l.b16 %v585
        %v626 = vunpack.c.l.b16 %v586
        %v627 = vunpack.c.l.b16 %v587
        %v628 = vunpack.c.l.b16 %v588
        %v629 = vunpack.c.l.b16 %v589
        %v630 = vunpack.c.l.b16 %v590
        %v631 = vunpack.c.l.b16 %v591
        %v632 = vpack.c.b16 %v617, %v616
        %v633 = vpack.c.b16 %v619, %v618
        %v634 = vpack.c.b16 %v621, %v620
        %v635 = vpack.c.b16 %v623, %v622
        %v636 = vpack.c.b16 %v625, %v624
        %v637 = vpack.c.b16 %v627, %v626
        %v638 = vpack.c.b16 %v629, %v628
        %v639 = vpack.c.b16 %v631, %v630
        %648 = vmatprep.subr.bf16.mxu0 0
        %649 = vmatpush1.bf16.msra.mxu0 %v632
        %650 = vmatprep.subr.bf16.mxu0 0
        %651 = vmatpush1.bf16.msra.mxu0 %v633
        %652 = vmatprep.subr.bf16.mxu0 0
        %653 = vmatpush1.bf16.msra.mxu0 %v634
        %654 = vmatprep.subr.bf16.mxu0 0
        %655 = vmatpush1.bf16.msra.mxu0 %v635
        %656 = vmatprep.subr.bf16.mxu0 0
        %657 = vmatpush1.bf16.msra.mxu0 %v636
        %658 = vmatprep.subr.bf16.mxu0 0
        %659 = vmatpush1.bf16.msra.mxu0 %v637
        %660 = vmatprep.subr.bf16.mxu0 0
        %661 = vmatpush1.bf16.msra.mxu0 %v638
        %662 = vmatprep.subr.bf16.mxu0 0
        %663 = vmatpush1.bf16.msra.mxu0 %v639
        %664 = vmatprep.subr.bf16.mxu0 0
        %665 = vmatpush1.bf16.msra.mxu0 0
        %666 = vmatprep.subr.bf16.mxu0 0
        %667 = vmatpush1.bf16.msra.mxu0 0
        %668 = vmatprep.subr.bf16.mxu0 0
        %669 = vmatpush1.bf16.msra.mxu0 0
        %670 = vmatprep.subr.bf16.mxu0 0
        %671 = vmatpush1.bf16.msra.mxu0 0
        %672 = vmatprep.subr.bf16.mxu0 0
        %673 = vmatpush1.bf16.msra.mxu0 0
        %674 = vmatprep.subr.bf16.mxu0 0
        %675 = vmatpush1.bf16.msra.mxu0 0
        %676 = vmatprep.subr.bf16.mxu0 0
        %677 = vmatpush1.bf16.msra.mxu0 0
        %678 = vmatprep.subr.bf16.mxu0 0
        %679 = vmatpush1.bf16.msra.mxu0 0
        %680 = vmatprep.mubr.bf16.mxu0 0
        %681 = vmatmul.mubr.bf16.gmra.mrb[0].mxu0 %v593
        %v682 = vpop.f32.mrb[0].mxu0
        %v683 = vadd.f32 %v598, %v682
        %v684 = vpop.f32.mrb[0].mxu0
        %v685 = vpop.f32.mrb[0].mxu0
        %v686 = vadd.f32 %v598, %v685
        %v687 = vpop.f32.mrb[0].mxu0
        %688 = vdwg.mxu0
        %v689 = vtanh.pop %v683
        %v690 = vtanh.pop %v686
        %691 = vst [vmem:[%s340] sm:$0xff] %v689
        %692 = vst [vmem:[%s340 + $0x8] sm:$0xff] %v690
        %s693 = sand.u32 %s186, 1
        %s694 = scalar_lea.sflag [#allocation4], %s693
        %s695 = sand.u32 %s186, 1
        %s696 = smul.addr %s695, 16
        %s697 = scalar_lea.vmem [#allocation10], %s696
        // Predicated region
        $region65: #{tpu_custom_call.1} parent=47 // pred_check
          %p698 = pneg %p196
        $region66: #{tpu_custom_call.1} parent=47 // pred_check_branch
          %700 = sbr.rel (%p698) target = $region68
        $region67: #{tpu_custom_call.1} parent=47 // pred_region
          %s701 = smul.u32 2, %s26
          %s703 = ssub.s32 256, 256
          %704 = vsyncadd %s694, %s703
          %s705 = smul.addr %s701, 128
          %s706 = scalar_lea.hbm %s7, %s705
          %s707 = sshll.u32 %s697, 4
          %s708 = int_to_ptr.vmem [resolvable:$true] %s707
          %713 = dma.vmem_to_hbm [thread:$0]  %s708, 256, %s706, %s694, 128, 128, 8
        $region68: #{tpu_custom_call.1} parent=47 // pred_fallthru
          _
      $region48: #{tpu_custom_call.1} parent=5 // pred_fallthru
        _
      %p714 = scmp.le.s32.totalorder 2, %s21
      // Predicated region
      $region69: #{tpu_custom_call.1} parent=5 // pred_check
        %p715 = pneg %p714
      $region70: #{tpu_custom_call.1} parent=5 // pred_check_branch
        %717 = sbr.rel (%p715) target = $region72
      $region71: #{tpu_custom_call.1} parent=5 // pred_region
        %s718 = ssub.s32 %s21, 2
        // Predicated region
        $region73: #{tpu_custom_call.1} parent=71 // pred_check
          %p719 = pneg %p202
        $region74: #{tpu_custom_call.1} parent=71 // pred_check_branch
          %721 = sbr.rel (%p719) target = $region76
        $region75: #{tpu_custom_call.1} parent=71 // pred_region
          %s722 = sand.u32 %s187, 1
          %s723 = scalar_lea.sflag [#allocation4], %s722
          %s724 = sand.u32 %s187, 1
          %s725 = smul.addr %s724, 16
          %s726 = scalar_lea.vmem [#allocation10], %s725
          %727 = dma.done %s723, 256
        $region76: #{tpu_custom_call.1} parent=71 // pred_fallthru
          _
      $region72: #{tpu_custom_call.1} parent=5 // pred_fallthru
        _
    $region6: #{tpu_custom_call.1} parent=1 // loop_footer
      %s25 = sadd.s32 1, %s21
    $region7: #{tpu_custom_call.1} parent=1 // loop_footer_branch
      %20 = sbr.rel target = $region3
    $region8: #{tpu_custom_call.1} parent=1 // loop_exit
      _
    %728 = vsyncpa [#allocation3], 1
    %s729 = scalar_lea.sflag [#allocation3], 1
    %730 = vsyncpa %s729, 1
    %731 = vsyncpa [#allocation6], 1
    %732 = vsyncpa [#allocation9], 1
    %733 = vsyncpa [#allocation4], 1
    %s734 = scalar_lea.sflag [#allocation4], 1
    %735 = vsyncpa %s734, 1

</llo_original>
